<compile_context>
chip_gen: v6e
topology: v6e:2x2x1
jax: 0.10.0
libtpu: 0.0.40
codegen_flags: <defaults>
</compile_context>

<pallas_src>
import jax
import jax.numpy as jnp
from jax import lax
from jax.experimental import pallas as pl
from jax.experimental.pallas import tpu as pltpu


LANE = 128


def _round_up(x, m):
    return (x + m - 1) // m * m


def fold_bn(gamma, beta, mean, var, eps=1e-5):
    scale = gamma / jnp.sqrt(var + eps)
    return scale, beta - mean * scale


def resblock_kernel(patches_ref, xskip_ref, w1_ref, b1_ref, w2_ref, ws_ref,
                    b2_ref, out_ref):
    # main branch: conv3x3 (im2col matmul, BN1 scale pre-folded into w1) + bias -> ReLU
    h = jnp.dot(patches_ref[...], w1_ref[...], preferred_element_type=jnp.float32)
    h = jnp.maximum(h + b1_ref[...], 0.0)
    # main branch: conv1x1 (BN2 scale pre-folded into w2)
    y = jnp.dot(h.astype(jnp.bfloat16), w2_ref[...], preferred_element_type=jnp.float32)
    # skip branch: conv1x1 on stride-subsampled input (BN scale pre-folded into ws)
    sk = jnp.dot(xskip_ref[...], ws_ref[...], preferred_element_type=jnp.float32)
    # residual add, combined (bn2 + bn_skip) bias, final ReLU
    out_ref[...] = jnp.maximum(y + sk + b2_ref[...], 0.0)


def resblock_forward(x_nchw, params, stride, *, tm=256):
    """ResBlock forward.  x_nchw: (B, Cin, H, W) f32.  Returns (B, Cout, Ho, Wo) f32.

    params = ((w1, bn1), (w2, bn2), skip) with skip = (ws, bns) for the conv skip
    or None for the identity skip (stride==1, Cin==Cout).
    """
    (w1, bn1), (w2, bn2), skip = params  # w1:(Co,Ci,3,3) w2:(Co,Co,1,1) ws:(Co,Ci,1,1)
    B, Cin, H, W = x_nchw.shape
    Cout = w1.shape[0]
    s = stride
    Ho = (H + 2 - 3) // s + 1
    Wo = (W + 2 - 3) // s + 1
    Cp = _round_up(Cout, LANE)   # lane-dense output-channel dim (unmasked vst)
    K1 = 9 * Cin
    M = B * Ho * Wo

    # --- glue: layout + im2col (bf16 -> half the HBM bytes of the 9x patches) ----
    # TODO(synk): for large activations, replace the 9x im2col blow-up with shifted
    # in-kernel dots over the padded NHWC input to cut main-input HBM read traffic.
    x = jnp.transpose(x_nchw, (0, 2, 3, 1)).astype(jnp.bfloat16)     # NHWC
    x_pad = jnp.pad(x, ((0, 0), (1, 1), (1, 1), (0, 0)))             # spatial pad=1
    cols = [x_pad[:, dy:dy + s * Ho:s, dx:dx + s * Wo:s, :]
            for dy in range(3) for dx in range(3)]
    patches = jnp.concatenate(cols, axis=-1).reshape(M, K1)
    xskip = x[:, ::s, ::s, :].reshape(M, Cin)

    # --- glue: BN folding into weights (constant-folded at trace time) -----------
    s1, b1 = fold_bn(*bn1)
    s2, b2 = fold_bn(*bn2)
    w1_mat = jnp.transpose(w1, (2, 3, 1, 0)).reshape(K1, Cout) * s1[None, :]
    w2_mat = jnp.transpose(w2[:, :, 0, 0], (1, 0)) * s2[None, :]
    if skip is None:
        # Identity skip: fold an identity matrix so the same kernel applies.
        assert Cin == Cout and s == 1, "identity skip requires stride=1, Cin==Cout"
        ws_mat = jnp.eye(Cin, Cout, dtype=jnp.float32)
        bs = jnp.zeros((Cout,), jnp.float32)
    else:
        ws, bns = skip
        ss, bs = fold_bn(*bns)
        ws_mat = jnp.transpose(ws[:, :, 0, 0], (1, 0)) * ss[None, :]

    pad_co = lambda m: jnp.pad(m, ((0, 0), (0, Cp - Cout)))
    w1f = pad_co(w1_mat).astype(jnp.bfloat16)                                      # (K1, Cp)
    w2f = jnp.pad(w2_mat, ((0, Cp - Cout), (0, Cp - Cout))).astype(jnp.bfloat16)   # (Cp, Cp)
    wsf = pad_co(ws_mat).astype(jnp.bfloat16)                                      # (Cin, Cp)
    b1f = pad_co(b1.reshape(1, Cout)).astype(jnp.float32)                          # (1, Cp)
    bcf = pad_co((b2 + bs).reshape(1, Cout)).astype(jnp.float32)                   # (1, Cp)

    # --- row tiling: pad M up to a multiple of tm (no divisibility assert) -------
    tm = min(tm, _round_up(M, 8))
    M_pad = _round_up(M, tm)
    if M_pad != M:
        patches = jnp.pad(patches, ((0, M_pad - M), (0, 0)))
        xskip = jnp.pad(xskip, ((0, M_pad - M), (0, 0)))

    resident = lambda shape: pl.BlockSpec(shape, lambda i: (0, 0))  # constant index -> fetched once
    out_flat = pl.pallas_call(
        resblock_kernel,
        out_shape=jax.ShapeDtypeStruct((M_pad, Cp), jnp.float32),
        grid_spec=pltpu.PrefetchScalarGridSpec(
            num_scalar_prefetch=0,
            grid=(M_pad // tm,),
            in_specs=[
                pl.BlockSpec((tm, K1), lambda i: (i, 0)),    # im2col patches
                pl.BlockSpec((tm, Cin), lambda i: (i, 0)),   # skip input
                resident((K1, Cp)),                          # w1 * bn1_scale
                resident((1, Cp)),                           # bn1 bias
                resident((Cp, Cp)),                          # w2 * bn2_scale
                resident((Cin, Cp)),                         # w_skip * bn_skip_scale
                resident((1, Cp)),                           # bn2 + bn_skip bias
            ],
            out_specs=pl.BlockSpec((tm, Cp), lambda i: (i, 0)),
        ),
        compiler_params=pltpu.CompilerParams(
            dimension_semantics=("parallel",),   # independent row tiles -> megacore
            vmem_limit_bytes=64 * 1024 * 1024,
        ),
    )(patches, xskip, w1f, b1f, w2f, wsf, bcf)

    out = out_flat[:M, :Cout].reshape(B, Ho, Wo, Cout)
    return jnp.transpose(out, (0, 3, 1, 2))   # back to NCHW to match the module


def resblock_reference(x_nchw, params, stride, *, cast_bf16=False):
    """Pure-JAX reference (lax.conv / einsum).  cast_bf16=True mirrors the kernel's
    bf16 operand quantization (with f32 accumulation) for a tight check."""
    (w1, bn1), (w2, bn2), skip = params
    s1, b1 = fold_bn(*bn1)
    s2, b2 = fold_bn(*bn2)
    x = jnp.transpose(x_nchw, (0, 2, 3, 1))
    w1_hwio = jnp.transpose(w1, (2, 3, 1, 0)) * s1
    w2_mat = jnp.transpose(w2[:, :, 0, 0], (1, 0)) * s2[None, :]
    if skip is None:
        ws_mat = jnp.eye(x.shape[-1], w1.shape[0], dtype=jnp.float32)
        bs = jnp.zeros((w1.shape[0],), jnp.float32)
    else:
        ws, bns = skip
        ss, bs = fold_bn(*bns)
        ws_mat = jnp.transpose(ws[:, :, 0, 0], (1, 0)) * ss[None, :]
    q = (lambda a: a.astype(jnp.bfloat16).astype(jnp.float32)) if cast_bf16 else (lambda a: a)
    x, w1_hwio, w2_mat, ws_mat = q(x), q(w1_hwio), q(w2_mat), q(ws_mat)
    dn = ("NHWC", "HWIO", "NHWC")
    h = lax.conv_general_dilated(x, w1_hwio, (stride, stride), ((1, 1), (1, 1)),
                                 dimension_numbers=dn,
                                 precision=lax.Precision.HIGHEST)
    h = q(jnp.maximum(h + b1, 0.0))
    y = jnp.einsum("bhwc,co->bhwo", h, w2_mat, precision=lax.Precision.HIGHEST)
    sk = jnp.einsum("bhwc,co->bhwo", x[:, ::stride, ::stride, :], ws_mat,
                    precision=lax.Precision.HIGHEST)
    out = jnp.maximum(y + sk + (b2 + bs), 0.0)
    return jnp.transpose(out, (0, 3, 1, 2))


def make_params(key, in_channels, out_channels):
    """Deterministic synthetic parameters (conv weights + BN stats, eval mode)."""
    kw1, kw2, kws, kb1, kb2, kbs = jax.random.split(key, 6)

    def bn(k, c):
        k0, k1, k2, k3 = jax.random.split(k, 4)
        gamma = 1.0 + 0.1 * jax.random.normal(k0, (c,), jnp.float32)
        beta = 0.1 * jax.random.normal(k1, (c,), jnp.float32)
        mean = 0.1 * jax.random.normal(k2, (c,), jnp.float32)
        var = jnp.abs(1.0 + 0.1 * jax.random.normal(k3, (c,), jnp.float32))
        return (gamma, beta, mean, var)

    w1 = 0.2 * jax.random.normal(kw1, (out_channels, in_channels, 3, 3), jnp.float32)
    w2 = 0.2 * jax.random.normal(kw2, (out_channels, out_channels, 1, 1), jnp.float32)
    wsk = 0.2 * jax.random.normal(kws, (out_channels, in_channels, 1, 1), jnp.float32)
    return ((w1, bn(kb1, out_channels)),
            (w2, bn(kb2, out_channels)),
            (wsk, bn(kbs, out_channels)))


if __name__ == "__main__":
    key = jax.random.PRNGKey(0)
    kx, kp = jax.random.split(key)

    B, Cin, Cout, H, W = 2, 4, 8, 16, 16
    # Matches PyTorch default: stride = 1 if in >= out else 2 -> here 2 (conv skip).
    stride = 1 if Cin >= Cout else 2

    x = jax.random.normal(kx, (B, Cin, H, W), jnp.float32)
    params = make_params(kp, Cin, Cout)

    out = jax.block_until_ready(resblock_forward(x, params, stride))
    assert out.shape == (B, Cout, H // stride, W // stride)

    # Tight check vs. a reference that uses the same bf16 operand quantization.
    ref_bf16 = resblock_reference(x, params, stride, cast_bf16=True)
    assert jnp.allclose(out, ref_bf16, atol=1e-2, rtol=1e-2), "mismatch vs bf16-consistent reference"
    # Loose sanity check vs. the pure-f32 module semantics.
    ref_f32 = resblock_reference(x, params, stride, cast_bf16=False)
    assert jnp.allclose(out, ref_f32, atol=1.5e-1, rtol=1e-1), "mismatch vs f32 reference"

    print("KERNEL_OK")
</pallas_src>

<mosaic_0001>
module attributes {stable_mosaic.version = 11 : i64} {
  func.func @resblock_kernel(%arg0: i32, %arg1: memref<128x36xbf16, #tpu.memory_space<vmem>>, %arg2: memref<128x4xbf16, #tpu.memory_space<vmem>>, %arg3: memref<36x128xbf16, #tpu.memory_space<vmem>>, %arg4: memref<1x128xf32, #tpu.memory_space<vmem>>, %arg5: memref<128x128xbf16, #tpu.memory_space<vmem>>, %arg6: memref<4x128xbf16, #tpu.memory_space<vmem>>, %arg7: memref<1x128xf32, #tpu.memory_space<vmem>>, %arg8: memref<128x128xf32, #tpu.memory_space<vmem>>) attributes {dimension_semantics = [#tpu.dimension_semantics<parallel>], iteration_bounds = array<i64: 1>, scalar_prefetch = 0 : i64, scratch_operands = 0 : i64, tpu.core_type = #tpu.core_type<tc>, window_params = [{transform_indices = @transform_0, window_bounds = array<i64: 128, 36>}, {transform_indices = @transform_1, window_bounds = array<i64: 128, 4>}, {pipeline_mode = #tpu.pipeline_mode<synchronous>, transform_indices = @transform_2, window_bounds = array<i64: 36, 128>}, {pipeline_mode = #tpu.pipeline_mode<synchronous>, transform_indices = @transform_3, window_bounds = array<i64: 1, 128>}, {pipeline_mode = #tpu.pipeline_mode<synchronous>, transform_indices = @transform_4, window_bounds = array<i64: 128, 128>}, {pipeline_mode = #tpu.pipeline_mode<synchronous>, transform_indices = @transform_5, window_bounds = array<i64: 4, 128>}, {pipeline_mode = #tpu.pipeline_mode<synchronous>, transform_indices = @transform_6, window_bounds = array<i64: 1, 128>}, {transform_indices = @transform_7, window_bounds = array<i64: 128, 128>}]} {
    %c0 = arith.constant 0 : index
    %c0_0 = arith.constant 0 : index
    %0 = vector.load %arg1[%c0, %c0_0] : memref<128x36xbf16, #tpu.memory_space<vmem>>, vector<128x36xbf16>
    %c0_1 = arith.constant 0 : index
    %c0_2 = arith.constant 0 : index
    %1 = vector.load %arg3[%c0_1, %c0_2] : memref<36x128xbf16, #tpu.memory_space<vmem>>, vector<36x128xbf16>
    %cst = arith.constant dense<0.000000e+00> : vector<128x128xf32>
    %2 = tpu.matmul %0, %1, %cst {dimension_numbers = #tpu.dot_dimension_numbers<[1], [0], [0], [1], [0, 0, 1, 1], [], []>} : vector<128x36xbf16>, vector<36x128xbf16>, vector<128x128xf32> -> vector<128x128xf32>
    %c0_3 = arith.constant 0 : index
    %c0_4 = arith.constant 0 : index
    %3 = vector.load %arg4[%c0_3, %c0_4] : memref<1x128xf32, #tpu.memory_space<vmem>>, vector<1x128xf32>
    %4 = vector.broadcast %3 : vector<1x128xf32> to vector<128x128xf32>
    %5 = arith.addf %2, %4 : vector<128x128xf32>
    %cst_5 = arith.constant 0.000000e+00 : f32
    %6 = vector.broadcast %cst_5 : f32 to vector<128x128xf32>
    %7 = arith.maximumf %5, %6 : vector<128x128xf32>
    %8 = arith.truncf %7 : vector<128x128xf32> to vector<128x128xbf16>
    %c0_6 = arith.constant 0 : index
    %c0_7 = arith.constant 0 : index
    %9 = vector.load %arg5[%c0_6, %c0_7] : memref<128x128xbf16, #tpu.memory_space<vmem>>, vector<128x128xbf16>
    %cst_8 = arith.constant dense<0.000000e+00> : vector<128x128xf32>
    %10 = tpu.matmul %8, %9, %cst_8 {dimension_numbers = #tpu.dot_dimension_numbers<[1], [0], [0], [1], [0, 0, 1, 1], [], []>} : vector<128x128xbf16>, vector<128x128xbf16>, vector<128x128xf32> -> vector<128x128xf32>
    %c0_9 = arith.constant 0 : index
    %c0_10 = arith.constant 0 : index
    %11 = vector.load %arg2[%c0_9, %c0_10] : memref<128x4xbf16, #tpu.memory_space<vmem>>, vector<128x4xbf16>
    %c0_11 = arith.constant 0 : index
    %c0_12 = arith.constant 0 : index
    %12 = vector.load %arg6[%c0_11, %c0_12] : memref<4x128xbf16, #tpu.memory_space<vmem>>, vector<4x128xbf16>
    %cst_13 = arith.constant dense<0.000000e+00> : vector<128x128xf32>
    %13 = tpu.matmul %11, %12, %cst_13 {dimension_numbers = #tpu.dot_dimension_numbers<[1], [0], [0], [1], [0, 0, 1, 1], [], []>} : vector<128x4xbf16>, vector<4x128xbf16>, vector<128x128xf32> -> vector<128x128xf32>
    %14 = arith.addf %10, %13 : vector<128x128xf32>
    %c0_14 = arith.constant 0 : index
    %c0_15 = arith.constant 0 : index
    %15 = vector.load %arg7[%c0_14, %c0_15] : memref<1x128xf32, #tpu.memory_space<vmem>>, vector<1x128xf32>
    %16 = vector.broadcast %15 : vector<1x128xf32> to vector<128x128xf32>
    %17 = arith.addf %14, %16 : vector<128x128xf32>
    %cst_16 = arith.constant 0.000000e+00 : f32
    %18 = vector.broadcast %cst_16 : f32 to vector<128x128xf32>
    %19 = arith.maximumf %17, %18 : vector<128x128xf32>
    %c0_17 = arith.constant 0 : index
    %c0_18 = arith.constant 0 : index
    %20 = vector.load %arg8[%c0_17, %c0_18] : memref<128x128xf32, #tpu.memory_space<vmem>>, vector<128x128xf32>
    tpu.vector_store %arg8[%c0_17, %c0_18], %19 {strides = array<i32>} : memref<128x128xf32, #tpu.memory_space<vmem>>, vector<128x128xf32>,
    return
  }
  func.func @transform_0(%arg0: i32) -> (i32, i32) {
    %c0_i32 = arith.constant 0 : i32
    %c0_i32_0 = arith.constant 0 : i32
    return %arg0, %c0_i32 : i32, i32
  }
  func.func @transform_1(%arg0: i32) -> (i32, i32) {
    %c0_i32 = arith.constant 0 : i32
    %c0_i32_0 = arith.constant 0 : i32
    return %arg0, %c0_i32 : i32, i32
  }
  func.func @transform_2(%arg0: i32) -> (i32, i32) {
    %c0_i32 = arith.constant 0 : i32
    %c0_i32_0 = arith.constant 0 : i32
    %c0_i32_1 = arith.constant 0 : i32
    return %c0_i32, %c0_i32_0 : i32, i32
  }
  func.func @transform_3(%arg0: i32) -> (i32, i32) {
    %c0_i32 = arith.constant 0 : i32
    %c0_i32_0 = arith.constant 0 : i32
    %c0_i32_1 = arith.constant 0 : i32
    return %c0_i32, %c0_i32_0 : i32, i32
  }
  func.func @transform_4(%arg0: i32) -> (i32, i32) {
    %c0_i32 = arith.constant 0 : i32
    %c0_i32_0 = arith.constant 0 : i32
    %c0_i32_1 = arith.constant 0 : i32
    return %c0_i32, %c0_i32_0 : i32, i32
  }
  func.func @transform_5(%arg0: i32) -> (i32, i32) {
    %c0_i32 = arith.constant 0 : i32
    %c0_i32_0 = arith.constant 0 : i32
    %c0_i32_1 = arith.constant 0 : i32
    return %c0_i32, %c0_i32_0 : i32, i32
  }
  func.func @transform_6(%arg0: i32) -> (i32, i32) {
    %c0_i32 = arith.constant 0 : i32
    %c0_i32_0 = arith.constant 0 : i32
    %c0_i32_1 = arith.constant 0 : i32
    return %c0_i32, %c0_i32_0 : i32, i32
  }
  func.func @transform_7(%arg0: i32) -> (i32, i32) {
    %c0_i32 = arith.constant 0 : i32
    %c0_i32_0 = arith.constant 0 : i32
    return %arg0, %c0_i32 : i32, i32
  }
}

</mosaic_0001>

<llo_original>
// kernel: tpu_custom_call.1
$region0: #{tpu_custom_call.1}
  #allocation0 [shape = 'u32[]', space=smem, size = 0x4, offset = 0x4, fixed_abs, tag = 'smem constant byte address 0x4 - core index']
  #allocation1 [shape = 'u32[144,128]{1,0:T(1,128)}', space=vmem, size = 0x12000, scoped, tag = 'internal scratch']
  %s0 = inlined_call_operand.vmem [shape: bf16[128,36], index: 0, kind: input, shape index: {}]
  %s1 = inlined_call_operand.vmem [shape: bf16[128,4], index: 1, kind: input, shape index: {}]
  %s2 = inlined_call_operand.vmem [shape: bf16[36,128], index: 2, kind: input, shape index: {}]
  %s3 = inlined_call_operand.vmem [shape: f32[1,128], index: 3, kind: input, shape index: {}]
  %s4 = inlined_call_operand.vmem [shape: bf16[128,128], index: 4, kind: input, shape index: {}]
  %s5 = inlined_call_operand.vmem [shape: bf16[4,128], index: 5, kind: input, shape index: {}]
  %s6 = inlined_call_operand.vmem [shape: f32[1,128], index: 6, kind: input, shape index: {}]
  %s7 = inlined_call_operand.hbm [shape: f32[128,128], index: 7, kind: output, shape index: {}]
  %s8 = sld [smem:[#allocation0]]
  $region38: #{tpu_custom_call.1} parent=0
    _
  %s10 = ssub.s32 1, %s8
  %s11 = scalar_select 0, %s10, %s8
  $region1: #{tpu_custom_call.1} parent=0
    #allocation2 [shape = 'u8[65536]{0}', space=vmem, size = 0x10000, scoped, tag = 'output window, operand 0, single buffered']
    #allocation3 [shape = 's32[1]{0}', space=sflag, size = 0x4, scoped, tag = 'scoped memory for tpu_custom_call.1']
    %12 = vsyncpa [#allocation3], 0
    // Predicated region
    $region2: #{tpu_custom_call.1} parent=1 // pred_check
      _
    $region3: #{tpu_custom_call.1} parent=1 // pred_check_branch
      %14 = sbr.rel (0) target = $region5
    $region4: #{tpu_custom_call.1} parent=1 // pred_region
      _
    $region5: #{tpu_custom_call.1} parent=1 // pred_fallthru
      _
    // Predicated region
    $region6: #{tpu_custom_call.1} parent=1 // pred_check
      _
    $region7: #{tpu_custom_call.1} parent=1 // pred_check_branch
      %16 = sbr.rel (0) target = $region9
    $region8: #{tpu_custom_call.1} parent=1 // pred_region
      _
    $region9: #{tpu_custom_call.1} parent=1 // pred_fallthru
      _
    // Predicated region
    $region10: #{tpu_custom_call.1} parent=1 // pred_check
      _
    $region11: #{tpu_custom_call.1} parent=1 // pred_check_branch
      %18 = sbr.rel (0) target = $region13
    $region12: #{tpu_custom_call.1} parent=1 // pred_region
      _
    $region13: #{tpu_custom_call.1} parent=1 // pred_fallthru
      _
    // Predicated region
    $region14: #{tpu_custom_call.1} parent=1 // pred_check
      _
    $region15: #{tpu_custom_call.1} parent=1 // pred_check_branch
      %20 = sbr.rel (0) target = $region17
    $region16: #{tpu_custom_call.1} parent=1 // pred_region
      _
    $region17: #{tpu_custom_call.1} parent=1 // pred_fallthru
      _
    // Predicated region
    $region18: #{tpu_custom_call.1} parent=1 // pred_check
      _
    $region19: #{tpu_custom_call.1} parent=1 // pred_check_branch
      %22 = sbr.rel (0) target = $region21
    $region20: #{tpu_custom_call.1} parent=1 // pred_region
      _
    $region21: #{tpu_custom_call.1} parent=1 // pred_fallthru
      _
    // Predicated region
    $region22: #{tpu_custom_call.1} parent=1 // pred_check
      _
    $region23: #{tpu_custom_call.1} parent=1 // pred_check_branch
      %24 = sbr.rel (0) target = $region25
    $region24: #{tpu_custom_call.1} parent=1 // pred_region
      _
    $region25: #{tpu_custom_call.1} parent=1 // pred_fallthru
      _
    // Predicated region
    $region26: #{tpu_custom_call.1} parent=1 // pred_check
      _
    $region27: #{tpu_custom_call.1} parent=1 // pred_check_branch
      %26 = sbr.rel (0) target = $region29
    $region28: #{tpu_custom_call.1} parent=1 // pred_region
      _
    $region29: #{tpu_custom_call.1} parent=1 // pred_fallthru
      _
    %v28 = vld [vmem:[%s0] sm:$0xf]
    %v29 = vld [vmem:[%s0 + $0x4] sm:$0xf]
    %v30 = vld [vmem:[%s0 + $0x8] sm:$0xf]
    %v31 = vld [vmem:[%s0 + $0xc] sm:$0xf]
    %v32 = vld [vmem:[%s0 + $0x10] sm:$0xf]
    %v33 = vld [vmem:[%s0 + $0x14] sm:$0xf]
    %v34 = vld [vmem:[%s0 + $0x18] sm:$0xf]
    %v35 = vld [vmem:[%s0 + $0x1c] sm:$0xf]
    %v36 = vld [vmem:[%s0 + $0x20] sm:$0xf]
    %v37 = vld [vmem:[%s0 + $0x24] sm:$0xf]
    %v38 = vld [vmem:[%s0 + $0x28] sm:$0xf]
    %v39 = vld [vmem:[%s0 + $0x2c] sm:$0xf]
    %v40 = vld [vmem:[%s0 + $0x30] sm:$0xf]
    %v41 = vld [vmem:[%s0 + $0x34] sm:$0xf]
    %v42 = vld [vmem:[%s0 + $0x38] sm:$0xf]
    %v43 = vld [vmem:[%s0 + $0x3c] sm:$0xf]
    %v44 = vld [vmem:[%s2] sm:$0xf]
    %v45 = vld [vmem:[%s2 + $0x4] sm:$0xf]
    %v46 = vld [vmem:[%s2 + $0x8] sm:$0xf]
    %v47 = vld [vmem:[%s2 + $0xc] sm:$0xf]
    %v48 = vld [vmem:[%s2 + $0x10] sm:$0x3]
    %v49 = vld [vmem:[%s3] sm:$0x1]
    %v51 = vlaneseq
    %v52 = vshrl.u32 %v51, 7
    %v53 = vsub.s32 0, %v52
    %v54 = vrot.slane %v49, %v53
    %v72 = vunpack.c.l.b16 %v28
    %v73 = vunpack.c.l.b16 %v29
    %v74 = vunpack.c.l.b16 %v30
    %v75 = vunpack.c.l.b16 %v31
    %v76 = vunpack.c.l.b16 %v32
    %v77 = vunpack.c.l.b16 %v33
    %v78 = vunpack.c.l.b16 %v34
    %v79 = vunpack.c.l.b16 %v35
    %v80 = vunpack.c.l.b16 %v36
    %v81 = vunpack.c.l.b16 %v37
    %v82 = vunpack.c.l.b16 %v38
    %v83 = vunpack.c.l.b16 %v39
    %v84 = vunpack.c.l.b16 %v40
    %v85 = vunpack.c.l.b16 %v41
    %v86 = vunpack.c.l.b16 %v42
    %v87 = vunpack.c.l.b16 %v43
    %v88 = vpack.c.b16 %v73, %v72
    %v89 = vpack.c.b16 %v75, %v74
    %v90 = vpack.c.b16 %v77, %v76
    %v91 = vpack.c.b16 %v79, %v78
    %v92 = vpack.c.b16 %v81, %v80
    %v93 = vpack.c.b16 %v83, %v82
    %v94 = vpack.c.b16 %v85, %v84
    %v95 = vpack.c.b16 %v87, %v86
    %v101 = vunpack.c.l.b16 %v44
    %v102 = vunpack.c.l.b16 %v45
    %v103 = vunpack.c.l.b16 %v46
    %v104 = vunpack.c.l.b16 %v47
    %v105 = vunpack.c.l.b16 %v48
    %v106 = vpack.c.b16 %v102, %v101
    %v107 = vpack.c.b16 %v104, %v103
    %v108 = vpack.c.b16 %v105, %v105
    %vm111 = vcmask 293888
    %v113 = vsel %vm111, %v88, 0
    %v116 = vsel %vm111, %v89, 0
    %v119 = vsel %vm111, %v90, 0
    %v122 = vsel %vm111, %v91, 0
    %v125 = vsel %vm111, %v92, 0
    %v128 = vsel %vm111, %v93, 0
    %v131 = vsel %vm111, %v94, 0
    %v134 = vsel %vm111, %v95, 0
    %vm136 = vcmask 1041408
    %v138 = vsel %vm136, %v108, 0
    %140 = vmatprep.subr.bf16.mxu0 0
    %141 = vmatpush1.bf16.msra.mxu0 0
    %142 = vmatprep.subr.bf16.mxu0 0
    %143 = vmatpush1.bf16.msra.mxu0 0
    %144 = vmatprep.subr.bf16.mxu0 0
    %145 = vmatpush1.bf16.msra.mxu0 0
    %146 = vmatprep.subr.bf16.mxu0 0
    %147 = vmatpush1.bf16.msra.mxu0 0
    %148 = vmatprep.subr.bf16.mxu0 0
    %149 = vmatpush1.bf16.msra.mxu0 0
    %150 = vmatprep.subr.bf16.mxu0 0
    %151 = vmatpush1.bf16.msra.mxu0 %v138
    %152 = vmatprep.subr.bf16.mxu0 0
    %153 = vmatpush1.bf16.msra.mxu0 %v107
    %154 = vmatprep.subr.bf16.mxu0 0
    %155 = vmatpush1.bf16.msra.mxu0 %v106
    %156 = vmatprep.subr.bf16.mxu0 0
    %157 = vmatpush2.bf16.msra.mxu0 0
    %158 = vmatprep.subr.bf16.mxu0 0
    %159 = vmatpush2.bf16.msra.mxu0 0
    %160 = vmatprep.subr.bf16.mxu0 0
    %161 = vmatpush2.bf16.msra.mxu0 0
    %162 = vmatprep.subr.bf16.mxu0 0
    %163 = vmatpush2.bf16.msra.mxu0 0
    %164 = vmatprep.subr.bf16.mxu0 0
    %165 = vmatpush2.bf16.msra.mxu0 0
    %166 = vmatprep.subr.bf16.mxu0 0
    %167 = vmatpush2.bf16.msra.mxu0 0
    %168 = vmatprep.subr.bf16.mxu0 0
    %169 = vmatpush2.bf16.msra.mxu0 0
    %170 = vmatprep.subr.bf16.mxu0 0
    %171 = vmatpush2.bf16.msra.mxu0 0
    %172 = vmatprep.mubr.bf16.mxu0 0
    %173 = vmatmul.mubr.bf16.gmra.mxu0 %v113
    %v174 = vpop.f32.mrf.mxu0
    %v175 = vadd.f32 %v54, %v174
    %v176 = vpop.f32.mrf.mxu0
    %v177 = vpop.f32.mrf.mxu0
    %v178 = vadd.f32 %v54, %v177
    %v179 = vpop.f32.mrf.mxu0
    %180 = vmatprep.mubr.bf16.mxu0 0
    %181 = vmatmul.mubr.bf16.gmra.mxu0 %v116
    %v182 = vpop.f32.mrf.mxu0
    %v183 = vadd.f32 %v54, %v182
    %v184 = vpop.f32.mrf.mxu0
    %v185 = vpop.f32.mrf.mxu0
    %v186 = vadd.f32 %v54, %v185
    %v187 = vpop.f32.mrf.mxu0
    %188 = vmatprep.mubr.bf16.mxu0 0
    %189 = vmatmul.mubr.bf16.gmra.mxu0 %v119
    %v190 = vpop.f32.mrf.mxu0
    %v191 = vadd.f32 %v54, %v190
    %v192 = vpop.f32.mrf.mxu0
    %v193 = vpop.f32.mrf.mxu0
    %v194 = vadd.f32 %v54, %v193
    %v195 = vpop.f32.mrf.mxu0
    %196 = vmatprep.mubr.bf16.mxu0 0
    %197 = vmatmul.mubr.bf16.gmra.mxu0 %v122
    %v198 = vpop.f32.mrf.mxu0
    %v199 = vadd.f32 %v54, %v198
    %v200 = vpop.f32.mrf.mxu0
    %v201 = vpop.f32.mrf.mxu0
    %v202 = vadd.f32 %v54, %v201
    %v203 = vpop.f32.mrf.mxu0
    %204 = vmatprep.mubr.bf16.mxu0 0
    %205 = vmatmul.mubr.bf16.gmra.mxu0 %v125
    %v206 = vpop.f32.mrf.mxu0
    %v207 = vadd.f32 %v54, %v206
    %v208 = vpop.f32.mrf.mxu0
    %v209 = vpop.f32.mrf.mxu0
    %v210 = vadd.f32 %v54, %v209
    %v211 = vpop.f32.mrf.mxu0
    %212 = vmatprep.mubr.bf16.mxu0 0
    %213 = vmatmul.mubr.bf16.gmra.mxu0 %v128
    %v214 = vpop.f32.mrf.mxu0
    %v215 = vadd.f32 %v54, %v214
    %v216 = vpop.f32.mrf.mxu0
    %v217 = vpop.f32.mrf.mxu0
    %v218 = vadd.f32 %v54, %v217
    %v219 = vpop.f32.mrf.mxu0
    %220 = vmatprep.mubr.bf16.mxu0 0
    %221 = vmatmul.mubr.bf16.gmra.mxu0 %v131
    %v222 = vpop.f32.mrf.mxu0
    %v223 = vadd.f32 %v54, %v222
    %v224 = vpop.f32.mrf.mxu0
    %v225 = vpop.f32.mrf.mxu0
    %v226 = vadd.f32 %v54, %v225
    %v227 = vpop.f32.mrf.mxu0
    %228 = vmatprep.mubr.bf16.mxu0 0
    %229 = vmatmul.mubr.bf16.gmra.mxu0 %v134
    %v230 = vpop.f32.mrf.mxu0
    %v231 = vadd.f32 %v54, %v230
    %v232 = vpop.f32.mrf.mxu0
    %v233 = vpop.f32.mrf.mxu0
    %v234 = vadd.f32 %v54, %v233
    %v235 = vpop.f32.mrf.mxu0
    %236 = vdwg.mxu0
    %v237 = vmax.f32 %v175, 0.0
    %v238 = vmax.f32 %v178, 0.0
    %v239 = vmax.f32 %v183, 0.0
    %v240 = vmax.f32 %v186, 0.0
    %v241 = vmax.f32 %v191, 0.0
    %v242 = vmax.f32 %v194, 0.0
    %v243 = vmax.f32 %v199, 0.0
    %v244 = vmax.f32 %v202, 0.0
    %v245 = vmax.f32 %v207, 0.0
    %v246 = vmax.f32 %v210, 0.0
    %v247 = vmax.f32 %v215, 0.0
    %v248 = vmax.f32 %v218, 0.0
    %v249 = vmax.f32 %v223, 0.0
    %v250 = vmax.f32 %v226, 0.0
    %v251 = vmax.f32 %v231, 0.0
    %v252 = vmax.f32 %v234, 0.0
    %v253 = vpack.c.bf16 %v238, %v237
    %v254 = vpack.c.bf16 %v240, %v239
    %v255 = vpack.c.bf16 %v242, %v241
    %v256 = vpack.c.bf16 %v244, %v243
    %v257 = vpack.c.bf16 %v246, %v245
    %v258 = vpack.c.bf16 %v248, %v247
    %v259 = vpack.c.bf16 %v250, %v249
    %v260 = vpack.c.bf16 %v252, %v251
    %v261 = vld [vmem:[%s4] sm:$0xf]
    %v262 = vld [vmem:[%s4 + $0x4] sm:$0xf]
    %v263 = vld [vmem:[%s4 + $0x8] sm:$0xf]
    %v264 = vld [vmem:[%s4 + $0xc] sm:$0xf]
    %v265 = vld [vmem:[%s4 + $0x10] sm:$0xf]
    %v266 = vld [vmem:[%s4 + $0x14] sm:$0xf]
    %v267 = vld [vmem:[%s4 + $0x18] sm:$0xf]
    %v268 = vld [vmem:[%s4 + $0x1c] sm:$0xf]
    %v269 = vld [vmem:[%s4 + $0x20] sm:$0xf]
    %v270 = vld [vmem:[%s4 + $0x24] sm:$0xf]
    %v271 = vld [vmem:[%s4 + $0x28] sm:$0xf]
    %v272 = vld [vmem:[%s4 + $0x2c] sm:$0xf]
    %v273 = vld [vmem:[%s4 + $0x30] sm:$0xf]
    %v274 = vld [vmem:[%s4 + $0x34] sm:$0xf]
    %v275 = vld [vmem:[%s4 + $0x38] sm:$0xf]
    %v276 = vld [vmem:[%s4 + $0x3c] sm:$0xf]
    %v277 = vld [vmem:[%s1] sm:$0xf]
    %v278 = vld [vmem:[%s1 + $0x4] sm:$0xf]
    %v279 = vld [vmem:[%s1 + $0x8] sm:$0xf]
    %v280 = vld [vmem:[%s1 + $0xc] sm:$0xf]
    %v281 = vld [vmem:[%s1 + $0x10] sm:$0xf]
    %v282 = vld [vmem:[%s1 + $0x14] sm:$0xf]
    %v283 = vld [vmem:[%s1 + $0x18] sm:$0xf]
    %v284 = vld [vmem:[%s1 + $0x1c] sm:$0xf]
    %v285 = vld [vmem:[%s1 + $0x20] sm:$0xf]
    %v286 = vld [vmem:[%s1 + $0x24] sm:$0xf]
    %v287 = vld [vmem:[%s1 + $0x28] sm:$0xf]
    %v288 = vld [vmem:[%s1 + $0x2c] sm:$0xf]
    %v289 = vld [vmem:[%s1 + $0x30] sm:$0xf]
    %v290 = vld [vmem:[%s1 + $0x34] sm:$0xf]
    %v291 = vld [vmem:[%s1 + $0x38] sm:$0xf]
    %v292 = vld [vmem:[%s1 + $0x3c] sm:$0xf]
    %v293 = vld [vmem:[%s5] sm:$0x3]
    %v310 = vunpack.c.l.b16 %v277
    %v311 = vunpack.c.l.b16 %v278
    %v312 = vunpack.c.l.b16 %v279
    %v313 = vunpack.c.l.b16 %v280
    %v314 = vunpack.c.l.b16 %v281
    %v315 = vunpack.c.l.b16 %v282
    %v316 = vunpack.c.l.b16 %v283
    %v317 = vunpack.c.l.b16 %v284
    %v318 = vunpack.c.l.b16 %v285
    %v319 = vunpack.c.l.b16 %v286
    %v320 = vunpack.c.l.b16 %v287
    %v321 = vunpack.c.l.b16 %v288
    %v322 = vunpack.c.l.b16 %v289
    %v323 = vunpack.c.l.b16 %v290
    %v324 = vunpack.c.l.b16 %v291
    %v325 = vunpack.c.l.b16 %v292
    %v326 = vpack.c.b16 %v311, %v310
    %v327 = vpack.c.b16 %v313, %v312
    %v328 = vpack.c.b16 %v315, %v314
    %v329 = vpack.c.b16 %v317, %v316
    %v330 = vpack.c.b16 %v319, %v318
    %v331 = vpack.c.b16 %v321, %v320
    %v332 = vpack.c.b16 %v323, %v322
    %v333 = vpack.c.b16 %v325, %v324
    %vm334 = vcmask 31744
    %v336 = vsel %vm334, %v326, 0
    %v339 = vsel %vm334, %v327, 0
    %v342 = vsel %vm334, %v328, 0
    %v345 = vsel %vm334, %v329, 0
    %v348 = vsel %vm334, %v330, 0
    %v351 = vsel %vm334, %v331, 0
    %v354 = vsel %vm334, %v332, 0
    %v357 = vsel %vm334, %v333, 0
    %v360 = vsel %vm136, %v293, 0
    %362 = vmatprep.subr.bf16.mxu0 0
    %363 = vmatpush1.bf16.msra.mxu0 0
    %364 = vmatprep.subr.bf16.mxu0 0
    %365 = vmatpush1.bf16.msra.mxu0 0
    %366 = vmatprep.subr.bf16.mxu0 0
    %367 = vmatpush1.bf16.msra.mxu0 0
    %368 = vmatprep.subr.bf16.mxu0 0
    %369 = vmatpush1.bf16.msra.mxu0 0
    %370 = vmatprep.subr.bf16.mxu0 0
    %371 = vmatpush1.bf16.msra.mxu0 0
    %372 = vmatprep.subr.bf16.mxu0 0
    %373 = vmatpush1.bf16.msra.mxu0 0
    %374 = vmatprep.subr.bf16.mxu0 0
    %375 = vmatpush1.bf16.msra.mxu0 0
    %376 = vmatprep.subr.bf16.mxu0 0
    %377 = vmatpush1.bf16.msra.mxu0 %v360
    %378 = vmatprep.subr.bf16.mxu0 0
    %379 = vmatpush2.bf16.msra.mxu0 0
    %380 = vmatprep.subr.bf16.mxu0 0
    %381 = vmatpush2.bf16.msra.mxu0 0
    %382 = vmatprep.subr.bf16.mxu0 0
    %383 = vmatpush2.bf16.msra.mxu0 0
    %384 = vmatprep.subr.bf16.mxu0 0
    %385 = vmatpush2.bf16.msra.mxu0 0
    %386 = vmatprep.subr.bf16.mxu0 0
    %387 = vmatpush2.bf16.msra.mxu0 0
    %388 = vmatprep.subr.bf16.mxu0 0
    %389 = vmatpush2.bf16.msra.mxu0 0
    %390 = vmatprep.subr.bf16.mxu0 0
    %391 = vmatpush2.bf16.msra.mxu0 0
    %392 = vmatprep.subr.bf16.mxu0 0
    %393 = vmatpush2.bf16.msra.mxu0 0
    %394 = vmatprep.mubr.bf16.mxu0 0
    %395 = vmatmul.mubr.bf16.gmra.mxu0 %v336
    %v396 = vpop.f32.mrf.mxu0
    %v397 = vadd.f32 0.0, %v396
    %v398 = vpop.f32.mrf.mxu0
    %v399 = vpop.f32.mrf.mxu0
    %v400 = vadd.f32 0.0, %v399
    %v401 = vpop.f32.mrf.mxu0
    %402 = vmatprep.mubr.bf16.mxu0 0
    %403 = vmatmul.mubr.bf16.gmra.mxu0 %v339
    %v404 = vpop.f32.mrf.mxu0
    %v405 = vadd.f32 0.0, %v404
    %v406 = vpop.f32.mrf.mxu0
    %v407 = vpop.f32.mrf.mxu0
    %v408 = vadd.f32 0.0, %v407
    %v409 = vpop.f32.mrf.mxu0
    %410 = vmatprep.mubr.bf16.mxu0 0
    %411 = vmatmul.mubr.bf16.gmra.mxu0 %v342
    %v412 = vpop.f32.mrf.mxu0
    %v413 = vadd.f32 0.0, %v412
    %v414 = vpop.f32.mrf.mxu0
    %v415 = vpop.f32.mrf.mxu0
    %v416 = vadd.f32 0.0, %v415
    %v417 = vpop.f32.mrf.mxu0
    %418 = vmatprep.mubr.bf16.mxu0 0
    %419 = vmatmul.mubr.bf16.gmra.mxu0 %v345
    %v420 = vpop.f32.mrf.mxu0
    %v421 = vadd.f32 0.0, %v420
    %v422 = vpop.f32.mrf.mxu0
    %v423 = vpop.f32.mrf.mxu0
    %v424 = vadd.f32 0.0, %v423
    %v425 = vpop.f32.mrf.mxu0
    %426 = vmatprep.mubr.bf16.mxu0 0
    %427 = vmatmul.mubr.bf16.gmra.mxu0 %v348
    %v428 = vpop.f32.mrf.mxu0
    %v429 = vadd.f32 0.0, %v428
    %v430 = vpop.f32.mrf.mxu0
    %v431 = vpop.f32.mrf.mxu0
    %v432 = vadd.f32 0.0, %v431
    %v433 = vpop.f32.mrf.mxu0
    %434 = vmatprep.mubr.bf16.mxu0 0
    %435 = vmatmul.mubr.bf16.gmra.mxu0 %v351
    %v436 = vpop.f32.mrf.mxu0
    %v437 = vadd.f32 0.0, %v436
    %v438 = vpop.f32.mrf.mxu0
    %v439 = vpop.f32.mrf.mxu0
    %v440 = vadd.f32 0.0, %v439
    %v441 = vpop.f32.mrf.mxu0
    %442 = vmatprep.mubr.bf16.mxu0 0
    %443 = vmatmul.mubr.bf16.gmra.mxu0 %v354
    %v444 = vpop.f32.mrf.mxu0
    %v445 = vadd.f32 0.0, %v444
    %v446 = vpop.f32.mrf.mxu0
    %v447 = vpop.f32.mrf.mxu0
    %v448 = vadd.f32 0.0, %v447
    %v449 = vpop.f32.mrf.mxu0
    %450 = vmatprep.mubr.bf16.mxu0 0
    %451 = vmatmul.mubr.bf16.gmra.mxu0 %v357
    %v452 = vpop.f32.mrf.mxu0
    %v453 = vadd.f32 0.0, %v452
    %v454 = vpop.f32.mrf.mxu0
    %v455 = vpop.f32.mrf.mxu0
    %v456 = vadd.f32 0.0, %v455
    %v457 = vpop.f32.mrf.mxu0
    %458 = vdwg.mxu0
    %v475 = vunpack.c.l.b16 %v261
    %v476 = vunpack.c.l.b16 %v262
    %v477 = vunpack.c.l.b16 %v263
    %v478 = vunpack.c.l.b16 %v264
    %v479 = vunpack.c.l.b16 %v265
    %v480 = vunpack.c.l.b16 %v266
    %v481 = vunpack.c.l.b16 %v267
    %v482 = vunpack.c.l.b16 %v268
    %v483 = vunpack.c.l.b16 %v269
    %v484 = vunpack.c.l.b16 %v270
    %v485 = vunpack.c.l.b16 %v271
    %v486 = vunpack.c.l.b16 %v272
    %v487 = vunpack.c.l.b16 %v273
    %v488 = vunpack.c.l.b16 %v274
    %v489 = vunpack.c.l.b16 %v275
    %v490 = vunpack.c.l.b16 %v276
    %v491 = vpack.c.b16 %v476, %v475
    %v492 = vpack.c.b16 %v478, %v477
    %v493 = vpack.c.b16 %v480, %v479
    %v494 = vpack.c.b16 %v482, %v481
    %v495 = vpack.c.b16 %v484, %v483
    %v496 = vpack.c.b16 %v486, %v485
    %v497 = vpack.c.b16 %v488, %v487
    %v498 = vpack.c.b16 %v490, %v489
    %507 = vmatprep.subr.bf16.mxu0 0
    %508 = vmatpush1.bf16.msra.mxu0 %v498
    %509 = vmatprep.subr.bf16.mxu0 0
    %510 = vmatpush1.bf16.msra.mxu0 %v497
    %511 = vmatprep.subr.bf16.mxu0 0
    %512 = vmatpush1.bf16.msra.mxu0 %v496
    %513 = vmatprep.subr.bf16.mxu0 0
    %514 = vmatpush1.bf16.msra.mxu0 %v495
    %515 = vmatprep.subr.bf16.mxu0 0
    %516 = vmatpush1.bf16.msra.mxu0 %v494
    %517 = vmatprep.subr.bf16.mxu0 0
    %518 = vmatpush1.bf16.msra.mxu0 %v493
    %519 = vmatprep.subr.bf16.mxu0 0
    %520 = vmatpush1.bf16.msra.mxu0 %v492
    %521 = vmatprep.subr.bf16.mxu0 0
    %522 = vmatpush1.bf16.msra.mxu0 %v491
    %523 = vmatprep.subr.bf16.mxu0 0
    %524 = vmatpush2.bf16.msra.mxu0 0
    %525 = vmatprep.subr.bf16.mxu0 0
    %526 = vmatpush2.bf16.msra.mxu0 0
    %527 = vmatprep.subr.bf16.mxu0 0
    %528 = vmatpush2.bf16.msra.mxu0 0
    %529 = vmatprep.subr.bf16.mxu0 0
    %530 = vmatpush2.bf16.msra.mxu0 0
    %531 = vmatprep.subr.bf16.mxu0 0
    %532 = vmatpush2.bf16.msra.mxu0 0
    %533 = vmatprep.subr.bf16.mxu0 0
    %534 = vmatpush2.bf16.msra.mxu0 0
    %535 = vmatprep.subr.bf16.mxu0 0
    %536 = vmatpush2.bf16.msra.mxu0 0
    %537 = vmatprep.subr.bf16.mxu0 0
    %538 = vmatpush2.bf16.msra.mxu0 0
    %539 = vmatprep.mubr.bf16.mxu0 0
    %540 = vmatmul.mubr.bf16.gmra.mxu0 %v253
    %v541 = vpop.f32.mrf.mxu0
    %v542 = vadd.f32 %v397, %v541
    %v543 = vpop.f32.mrf.mxu0
    %v544 = vpop.f32.mrf.mxu0
    %v545 = vadd.f32 %v400, %v544
    %v546 = vpop.f32.mrf.mxu0
    %547 = vmatprep.mubr.bf16.mxu0 0
    %548 = vmatmul.mubr.bf16.gmra.mxu0 %v254
    %v549 = vpop.f32.mrf.mxu0
    %v550 = vadd.f32 %v405, %v549
    %v551 = vpop.f32.mrf.mxu0
    %v552 = vpop.f32.mrf.mxu0
    %v553 = vadd.f32 %v408, %v552
    %v554 = vpop.f32.mrf.mxu0
    %555 = vmatprep.mubr.bf16.mxu0 0
    %556 = vmatmul.mubr.bf16.gmra.mxu0 %v255
    %v557 = vpop.f32.mrf.mxu0
    %v558 = vadd.f32 %v413, %v557
    %v559 = vpop.f32.mrf.mxu0
    %v560 = vpop.f32.mrf.mxu0
    %v561 = vadd.f32 %v416, %v560
    %v562 = vpop.f32.mrf.mxu0
    %563 = vmatprep.mubr.bf16.mxu0 0
    %564 = vmatmul.mubr.bf16.gmra.mxu0 %v256
    %v565 = vpop.f32.mrf.mxu0
    %v566 = vadd.f32 %v421, %v565
    %v567 = vpop.f32.mrf.mxu0
    %v568 = vpop.f32.mrf.mxu0
    %v569 = vadd.f32 %v424, %v568
    %v570 = vpop.f32.mrf.mxu0
    %571 = vmatprep.mubr.bf16.mxu0 0
    %572 = vmatmul.mubr.bf16.gmra.mxu0 %v257
    %v573 = vpop.f32.mrf.mxu0
    %v574 = vadd.f32 %v429, %v573
    %v575 = vpop.f32.mrf.mxu0
    %v576 = vpop.f32.mrf.mxu0
    %v577 = vadd.f32 %v432, %v576
    %v578 = vpop.f32.mrf.mxu0
    %579 = vmatprep.mubr.bf16.mxu0 0
    %580 = vmatmul.mubr.bf16.gmra.mxu0 %v258
    %v581 = vpop.f32.mrf.mxu0
    %v582 = vadd.f32 %v437, %v581
    %v583 = vpop.f32.mrf.mxu0
    %v584 = vpop.f32.mrf.mxu0
    %v585 = vadd.f32 %v440, %v584
    %v586 = vpop.f32.mrf.mxu0
    %587 = vmatprep.mubr.bf16.mxu0 0
    %588 = vmatmul.mubr.bf16.gmra.mxu0 %v259
    %v589 = vpop.f32.mrf.mxu0
    %v590 = vadd.f32 %v445, %v589
    %v591 = vpop.f32.mrf.mxu0
    %v592 = vpop.f32.mrf.mxu0
    %v593 = vadd.f32 %v448, %v592
    %v594 = vpop.f32.mrf.mxu0
    %595 = vmatprep.mubr.bf16.mxu0 0
    %596 = vmatmul.mubr.bf16.gmra.mxu0 %v260
    %v597 = vpop.f32.mrf.mxu0
    %v598 = vadd.f32 %v453, %v597
    %v599 = vpop.f32.mrf.mxu0
    %v600 = vpop.f32.mrf.mxu0
    %v601 = vadd.f32 %v456, %v600
    %v602 = vpop.f32.mrf.mxu0
    %603 = vdwg.mxu0
    %v604 = vld [vmem:[%s6] sm:$0x1]
    %v606 = vlaneseq
    %v607 = vshrl.u32 %v606, 7
    %v608 = vsub.s32 0, %v607
    %v609 = vrot.slane %v604, %v608
    %v611 = vadd.f32 %v542, %v609
    %v612 = vadd.f32 %v545, %v609
    %v613 = vadd.f32 %v550, %v609
    %v614 = vadd.f32 %v553, %v609
    %v615 = vadd.f32 %v558, %v609
    %v616 = vadd.f32 %v561, %v609
    %v617 = vadd.f32 %v566, %v609
    %v618 = vadd.f32 %v569, %v609
    %v619 = vadd.f32 %v574, %v609
    %v620 = vadd.f32 %v577, %v609
    %v621 = vadd.f32 %v582, %v609
    %v622 = vadd.f32 %v585, %v609
    %v623 = vadd.f32 %v590, %v609
    %v624 = vadd.f32 %v593, %v609
    %v625 = vadd.f32 %v598, %v609
    %v626 = vadd.f32 %v601, %v609
    %v627 = vmax.f32 %v611, 0.0
    %v628 = vmax.f32 %v612, 0.0
    %v629 = vmax.f32 %v613, 0.0
    %v630 = vmax.f32 %v614, 0.0
    %v631 = vmax.f32 %v615, 0.0
    %v632 = vmax.f32 %v616, 0.0
    %v633 = vmax.f32 %v617, 0.0
    %v634 = vmax.f32 %v618, 0.0
    %v635 = vmax.f32 %v619, 0.0
    %v636 = vmax.f32 %v620, 0.0
    %v637 = vmax.f32 %v621, 0.0
    %v638 = vmax.f32 %v622, 0.0
    %v639 = vmax.f32 %v623, 0.0
    %v640 = vmax.f32 %v624, 0.0
    %v641 = vmax.f32 %v625, 0.0
    %v642 = vmax.f32 %v626, 0.0
    %643 = vst [vmem:[#allocation2] sm:$0xff] %v627
    %644 = vst [vmem:[#allocation2 + $0x8] sm:$0xff] %v628
    %645 = vst [vmem:[#allocation2 + $0x10] sm:$0xff] %v629
    %646 = vst [vmem:[#allocation2 + $0x18] sm:$0xff] %v630
    %647 = vst [vmem:[#allocation2 + $0x20] sm:$0xff] %v631
    %648 = vst [vmem:[#allocation2 + $0x28] sm:$0xff] %v632
    %649 = vst [vmem:[#allocation2 + $0x30] sm:$0xff] %v633
    %650 = vst [vmem:[#allocation2 + $0x38] sm:$0xff] %v634
    %651 = vst [vmem:[#allocation2 + $0x40] sm:$0xff] %v635
    %652 = vst [vmem:[#allocation2 + $0x48] sm:$0xff] %v636
    %653 = vst [vmem:[#allocation2 + $0x50] sm:$0xff] %v637
    %654 = vst [vmem:[#allocation2 + $0x58] sm:$0xff] %v638
    %655 = vst [vmem:[#allocation2 + $0x60] sm:$0xff] %v639
    %656 = vst [vmem:[#allocation2 + $0x68] sm:$0xff] %v640
    %657 = vst [vmem:[#allocation2 + $0x70] sm:$0xff] %v641
    %658 = vst [vmem:[#allocation2 + $0x78] sm:$0xff] %v642
    // Predicated region
    $region30: #{tpu_custom_call.1} parent=1 // pred_check
      _
    $region31: #{tpu_custom_call.1} parent=1 // pred_check_branch
      %660 = sbr.rel (0) target = $region33
    $region32: #{tpu_custom_call.1} parent=1 // pred_region
      %s662 = ssub.s32 2048, 2048
      %663 = vsyncadd [#allocation3], %s662
      %s664 = sshll.u32 [#allocation2], 4
      %s665 = int_to_ptr.vmem [resolvable:$true] %s664
      %670 = dma.vmem_to_hbm [thread:$0]  %s665, 2048, %s7, [#allocation3], 128, 128, 8
    $region33: #{tpu_custom_call.1} parent=1 // pred_fallthru
      _
    // Predicated region
    $region34: #{tpu_custom_call.1} parent=1 // pred_check
      _
    $region35: #{tpu_custom_call.1} parent=1 // pred_check_branch
      %672 = sbr.rel (0) target = $region37
    $region36: #{tpu_custom_call.1} parent=1 // pred_region
      %673 = dma.done [#allocation3], 2048
    $region37: #{tpu_custom_call.1} parent=1 // pred_fallthru
      _
    %674 = vsyncpa [#allocation3], 1

</llo_original>
